<compile_context>
chip_gen: v6e
topology: v6e:2x2x1
jax: 0.10.0
libtpu: 0.0.40
codegen_flags: <defaults>
</compile_context>

<pallas_src>
import functools
import math

import jax
import jax.numpy as jnp
from jax import lax
from jax.experimental import pallas as pl
from jax.experimental.pallas import tpu as pltpu

LN_EPS = 1e-5  # PyTorch nn.LayerNorm default


def _patch_merge_kernel(x_ref, w_ref, p_ref, o_ref, *, scale_rate, ln_eps):
    """Fused 2x2 merge + LayerNorm + Linear, with LN folded into the epilogue.

    x_ref: (th, s, W2, s*C)   input row-tile; slab i = source-row offset i,
                              features already in PyTorch concat order (i, j).
    w_ref: (s, s*C, Cout_p)   gamma-folded reduction weight, split per slab,
                              same dtype as x (bf16 input -> bf16 MXU path).
    p_ref: (2, Cout_p) f32    row 0: column sums of the folded weight,
                              row 1: beta @ w_red (output bias).
    o_ref: (th*W2, Cout_p)    token-major (lane-dense) output tile.
    """
    s = scale_rate
    th, _, Ws, sC = x_ref.shape
    tok = th * Ws
    inv = 1.0 / float(s * sC)  # 1 / (s^2 * C)

    x4 = x_ref[...]            # (th, s, W2, s*C), raw input dtype
    w = w_ref[...]             # (s, s*C, Cout_p)

    acc = tot = sq = None
    for i in range(s):
        # Free view when Ws % 8 == 0 (sublane-aligned flatten); otherwise a
        # one-off VMEM relayout of the slab (accepted, see wrapper comment).
        xi = x4[:, i].reshape(tok, sC)
        # Raw-input matmul straight into the MXU with f32 accumulation; the
        # LN normalization is applied afterwards on the (tok, Cout) result.
        mi = jnp.dot(xi, w[i], preferred_element_type=jnp.float32)
        # One-pass statistics contributions (f32).
        xf = xi.astype(jnp.float32)
        ti = xf.sum(axis=-1, keepdims=True)
        qi = (xf * xf).sum(axis=-1, keepdims=True)
        if i == 0:
            acc, tot, sq = mi, ti, qi
        else:
            acc, tot, sq = acc + mi, tot + ti, sq + qi

    mean = tot * inv                                    # (tok, 1)
    var = jnp.maximum(sq * inv - mean * mean, 0.0)      # clamp cancellation
    r = lax.rsqrt(var + ln_eps)                         # (tok, 1)

    colsum = p_ref[0:1, :]                              # (1, Cout_p) f32
    bias = p_ref[1:2, :]                                # (1, Cout_p) f32

    # LN fold:  ((x - mean) * r * gamma) @ w + beta @ w
    #         =  r * (x @ (gamma*w)) - (r*mean) * colsum(gamma*w) + beta @ w
    out = acc * r - (r * mean) * colsum + bias          # (tok, Cout_p) f32
    o_ref[...] = out.astype(o_ref.dtype)


def _vmem_config():
    """Generation-aware scoped-VMEM limit, tile budget and target tile size."""
    cap = 64 * 1024 * 1024  # conservative fallback (v7x per-TensorCore VMEM)
    try:
        info = pltpu.get_tpu_info()
        cap = int(getattr(info, "vmem_capacity_bytes", cap))
    except Exception:
        pass
    if cap <= 80 * 1024 * 1024:                 # v7x-class part (64 MiB / TC)
        limit = min(cap - 8 * 1024 * 1024, 56 * 1024 * 1024)
        target_tokens = 2048
    else:                                        # v5e / v6e (128 MiB)
        limit = min(cap - 16 * 1024 * 1024, 108 * 1024 * 1024)
        target_tokens = 8192
    budget = limit - 6 * 1024 * 1024             # headroom for internal scratch
    return int(limit), int(budget), target_tokens


def _pick_row_tile(R, W2, C4, Cout_p, x_item, w_item, out_item, *,
                   target_tokens, vmem_budget_bytes):
    """Output row-groups (each = W2 tokens) processed per grid step.

    Preferences: fit the VMEM budget; keep th*W2 a multiple of 8 so the flat
    (th*W2, Cout) output block is sublane-dense; even step count >= 2 so the
    'parallel' grid axis balances across v7x's two TensorCores.
    """
    # Resident weight (double-buffered allocation) + small params.
    weight_bytes = 2 * C4 * Cout_p * w_item + 2 * 2 * Cout_p * 4
    # Per output row-group (W2 tokens).
    per_row = W2 * (2 * C4 * x_item            # input tile, double-buffered
                    + 2 * Cout_p * out_item    # output tile, double-buffered
                    + Cout_p * 4               # f32 accumulator
                    + C4 * 4)                  # f32 stats / slab-copy headroom
    avail = max(vmem_budget_bytes - weight_bytes, per_row)
    max_rows = max(1, avail // per_row)
    tgt_rows = max(1, -(-target_tokens // max(W2, 1)))
    th_cap = int(min(R, max_rows, tgt_rows))

    if R <= 1:
        return 1

    mult = 8 // math.gcd(W2, 8)     # th multiple keeping th*W2 % 8 == 0
    cands = [t for t in range(th_cap, 0, -1) if t % mult == 0]
    nsteps = lambda t: -(-R // t)
    preferences = (
        lambda t: R % t == 0 and nsteps(t) % 2 == 0,   # exact divisor, even steps
        lambda t: nsteps(t) % 2 == 0,                  # even steps
        lambda t: nsteps(t) >= 2,                      # any multi-step
    )
    for ok in preferences:
        for t in cands:
            if ok(t):
                return t
    return R  # single full-array step (block == array, no alignment needed)


def patch_merging_pallas(x, H, W, gamma, beta, w_red, *, scale_rate=2):
    """Forward of PatchMerging.

    Args:
      x:      (B, H*W, C) input features.
      gamma:  (scale_rate**2 * C,) LayerNorm weight.
      beta:   (scale_rate**2 * C,) LayerNorm bias.
      w_red:  (scale_rate**2 * C, scale_rate * C) reduction weight, stored
              transposed relative to torch.nn.Linear.weight.
    Returns:
      (B, ceil(H/s)*ceil(W/s), scale_rate*C)
    """
    B, L, C = x.shape
    assert L == H * W, "input feature has wrong size"
    s = scale_rate

    xr = x.reshape(B, H, W, C)
    pad_h, pad_w = (-H) % s, (-W) % s
    if pad_h or pad_w:
        xr = jnp.pad(xr, ((0, 0), (0, pad_h), (0, pad_w), (0, 0)))
    Hp, Wp = H + pad_h, W + pad_w
    H2, W2 = Hp // s, Wp // s
    C4 = s * s * C
    Cout = s * C
    R = B * H2

    # FREE reshape: (B, Hp, Wp, C) -> (B*H2, s, W2, s*C).  Slab i of each
    # output row-group holds the contiguous [j=0..s-1] features, i.e. exactly
    # PyTorch's concat order (i, j); no (tok, 4C) intermediate in HBM.
    xv = xr.reshape(R, s, W2, s * C)

    # Fold LayerNorm affine into the reduction weight (f32 fold).
    gamma32 = gamma.astype(jnp.float32)
    beta32 = beta.astype(jnp.float32)
    w32 = w_red.astype(jnp.float32)
    wf32 = gamma32[:, None] * w32            # (C4, Cout)
    bias32 = jnp.dot(beta32, w32)            # (Cout,)
    colsum32 = jnp.sum(wf32, axis=0)         # (Cout,)  column sums of folded w

    # Pad output columns to a multiple of 128 (lane-dense stores, full-width
    # MXU tiles) when the overhead is modest; padded columns are sliced off.
    Cout_p = Cout
    if Cout % 128 != 0:
        cand = -(-Cout // 128) * 128
        if 2 * cand <= 3 * Cout:             # <= 1.5x waste
            Cout_p = cand
    if Cout_p != Cout:
        pad = Cout_p - Cout
        wf32 = jnp.pad(wf32, ((0, 0), (0, pad)))
        bias32 = jnp.pad(bias32, ((0, pad),))
        colsum32 = jnp.pad(colsum32, ((0, pad),))

    # Cast ONCE to the input dtype (bf16 input -> native bf16 MXU path).
    w_folded = wf32.astype(x.dtype).reshape(s, s * C, Cout_p)
    params = jnp.stack([colsum32, bias32])   # (2, Cout_p) f32

    vmem_limit, vmem_budget, target_tokens = _vmem_config()
    th = _pick_row_tile(
        R, W2, C4, Cout_p,
        jnp.dtype(x.dtype).itemsize,
        jnp.dtype(w_folded.dtype).itemsize,
        jnp.dtype(x.dtype).itemsize,
        target_tokens=target_tokens,
        vmem_budget_bytes=vmem_budget)
    grid = (pl.cdiv(R, th),)

    kernel = functools.partial(_patch_merge_kernel, scale_rate=s, ln_eps=LN_EPS)

    out = pl.pallas_call(
        kernel,
        out_shape=jax.ShapeDtypeStruct((R * W2, Cout_p), x.dtype),
        grid_spec=pltpu.PrefetchScalarGridSpec(
            num_scalar_prefetch=0,
            grid=grid,
            in_specs=[
                pl.BlockSpec((th, s, W2, s * C), lambda i: (i, 0, 0, 0)),
                pl.BlockSpec((s, s * C, Cout_p), lambda i: (0, 0, 0)),  # fetched once
                pl.BlockSpec((2, Cout_p), lambda i: (0, 0)),            # fetched once
            ],
            out_specs=pl.BlockSpec((th * W2, Cout_p), lambda i: (i, 0)),
        ),
        compiler_params=pltpu.CompilerParams(
            dimension_semantics=("parallel",),
            vmem_limit_bytes=vmem_limit,
        ),
    )(xv, w_folded, params)

    if Cout_p != Cout:
        out = out[:, :Cout]
    return out.reshape(B, H2 * W2, Cout)


def _reference(x, H, W, gamma, beta, w_red, scale_rate=2):
    """Pure-JAX reference mirroring the PyTorch forward exactly."""
    B, L, C = x.shape
    s = scale_rate
    xr = x.reshape(B, H, W, C)
    pad_h, pad_w = (-H) % s, (-W) % s
    if pad_h or pad_w:
        xr = jnp.pad(xr, ((0, 0), (0, pad_h), (0, pad_w), (0, 0)))
    x_list = []
    for i in range(s):
        for j in range(s):
            x_list.append(xr[:, i::s, j::s, :])
    xm = jnp.concatenate(x_list, axis=-1)
    xm = xm.reshape(B, -1, s * s * C).astype(jnp.float32)
    mean = jnp.mean(xm, axis=-1, keepdims=True)
    var = jnp.mean((xm - mean) ** 2, axis=-1, keepdims=True)
    xn = (xm - mean) / jnp.sqrt(var + LN_EPS)
    y = xn * gamma.astype(jnp.float32) + beta.astype(jnp.float32)
    return jnp.einsum("blk,kn->bln", y, w_red.astype(jnp.float32))


if __name__ == "__main__":
    # Small shapes consistent with the module: B=2, C=4, H=W=16 -> x: (2, 256, 4)
    B, C, H, W = 2, 4, 16, 16
    scale_rate = 2
    dim4 = scale_rate ** 2 * C      # 16
    dim2 = scale_rate * C           # 8

    key = jax.random.PRNGKey(0)
    kx, kw, kg, kb = jax.random.split(key, 4)

    x = jax.random.normal(kx, (B, H * W, C), dtype=jnp.float32)
    # Deterministic synthetic parameters (no checkpoint loading).
    w_red = jax.random.normal(kw, (dim4, dim2), dtype=jnp.float32) * 0.05
    gamma = jnp.ones((dim4,), dtype=jnp.float32) + 0.01 * jax.random.normal(kg, (dim4,))
    beta = 0.01 * jax.random.normal(kb, (dim4,), dtype=jnp.float32)

    out = patch_merging_pallas(x, H, W, gamma, beta, w_red, scale_rate=scale_rate)
    out = jax.block_until_ready(out)

    ref = _reference(x, H, W, gamma, beta, w_red, scale_rate=scale_rate)
    assert out.shape == (B, (H // 2) * (W // 2), dim2), out.shape
    max_err = float(jnp.max(jnp.abs(out - ref.astype(out.dtype))))
    assert jnp.allclose(out, ref.astype(out.dtype), atol=5e-4, rtol=5e-4), max_err

    print("KERNEL_OK")
</pallas_src>

<mosaic_0001>
module attributes {stable_mosaic.version = 11 : i64} {
  func.func @_patch_merge_kernel(%arg0: i32, %arg1: memref<8x2x8x8xf32, #tpu.memory_space<vmem>>, %arg2: memref<2x8x8xf32, #tpu.memory_space<vmem>>, %arg3: memref<2x8xf32, #tpu.memory_space<vmem>>, %arg4: memref<64x8xf32, #tpu.memory_space<vmem>>) attributes {dimension_semantics = [#tpu.dimension_semantics<parallel>], iteration_bounds = array<i64: 2>, scalar_prefetch = 0 : i64, scratch_operands = 0 : i64, tpu.core_type = #tpu.core_type<tc>, window_params = [{transform_indices = @transform_0, window_bounds = array<i64: 8, 2, 8, 8>}, {pipeline_mode = #tpu.pipeline_mode<synchronous>, transform_indices = @transform_1, window_bounds = array<i64: 2, 8, 8>}, {pipeline_mode = #tpu.pipeline_mode<synchronous>, transform_indices = @transform_2, window_bounds = array<i64: 2, 8>}, {transform_indices = @transform_3, window_bounds = array<i64: 64, 8>}]} {
    %c0 = arith.constant 0 : index
    %c0_0 = arith.constant 0 : index
    %c0_1 = arith.constant 0 : index
    %c0_2 = arith.constant 0 : index
    %0 = vector.load %arg1[%c0, %c0_0, %c0_1, %c0_2] : memref<8x2x8x8xf32, #tpu.memory_space<vmem>>, vector<8x2x8x8xf32>
    %c0_3 = arith.constant 0 : index
    %c0_4 = arith.constant 0 : index
    %c0_5 = arith.constant 0 : index
    %1 = vector.load %arg2[%c0_3, %c0_4, %c0_5] : memref<2x8x8xf32, #tpu.memory_space<vmem>>, vector<2x8x8xf32>
    %2 = vector.extract_strided_slice %0 {offsets = [0, 0, 0, 0], sizes = [8, 1, 8, 8], strides = [1, 1, 1, 1]} : vector<8x2x8x8xf32> to vector<8x1x8x8xf32>
    %3 = vector.shape_cast %2 : vector<8x1x8x8xf32> to vector<8x8x8xf32>
    %4 = vector.shape_cast %3 : vector<8x8x8xf32> to vector<64x8xf32>
    %5 = vector.extract_strided_slice %1 {offsets = [0, 0, 0], sizes = [1, 8, 8], strides = [1, 1, 1]} : vector<2x8x8xf32> to vector<1x8x8xf32>
    %6 = vector.shape_cast %5 : vector<1x8x8xf32> to vector<8x8xf32>
    %cst = arith.constant dense<0.000000e+00> : vector<64x8xf32>
    %7 = tpu.matmul %4, %6, %cst {dimension_numbers = #tpu.dot_dimension_numbers<[1], [0], [0], [1], [0, 0, 1, 1], [], []>} : vector<64x8xf32>, vector<8x8xf32>, vector<64x8xf32> -> vector<64x8xf32>
    %cst_6 = arith.constant dense<0.000000e+00> : vector<64xf32>
    %8 = vector.multi_reduction <add>, %4, %cst_6 [1] : vector<64x8xf32> to vector<64xf32>
    %9 = vector.shape_cast %8 : vector<64xf32> to vector<64x1xf32>
    %10 = arith.mulf %4, %4 : vector<64x8xf32>
    %cst_7 = arith.constant dense<0.000000e+00> : vector<64xf32>
    %11 = vector.multi_reduction <add>, %10, %cst_7 [1] : vector<64x8xf32> to vector<64xf32>
    %12 = vector.shape_cast %11 : vector<64xf32> to vector<64x1xf32>
    %13 = vector.extract_strided_slice %0 {offsets = [0, 1, 0, 0], sizes = [8, 1, 8, 8], strides = [1, 1, 1, 1]} : vector<8x2x8x8xf32> to vector<8x1x8x8xf32>
    %14 = vector.shape_cast %13 : vector<8x1x8x8xf32> to vector<8x8x8xf32>
    %15 = vector.shape_cast %14 : vector<8x8x8xf32> to vector<64x8xf32>
    %16 = vector.extract_strided_slice %1 {offsets = [1, 0, 0], sizes = [1, 8, 8], strides = [1, 1, 1]} : vector<2x8x8xf32> to vector<1x8x8xf32>
    %17 = vector.shape_cast %16 : vector<1x8x8xf32> to vector<8x8xf32>
    %cst_8 = arith.constant dense<0.000000e+00> : vector<64x8xf32>
    %18 = tpu.matmul %15, %17, %cst_8 {dimension_numbers = #tpu.dot_dimension_numbers<[1], [0], [0], [1], [0, 0, 1, 1], [], []>} : vector<64x8xf32>, vector<8x8xf32>, vector<64x8xf32> -> vector<64x8xf32>
    %cst_9 = arith.constant dense<0.000000e+00> : vector<64xf32>
    %19 = vector.multi_reduction <add>, %15, %cst_9 [1] : vector<64x8xf32> to vector<64xf32>
    %20 = vector.shape_cast %19 : vector<64xf32> to vector<64x1xf32>
    %21 = arith.mulf %15, %15 : vector<64x8xf32>
    %cst_10 = arith.constant dense<0.000000e+00> : vector<64xf32>
    %22 = vector.multi_reduction <add>, %21, %cst_10 [1] : vector<64x8xf32> to vector<64xf32>
    %23 = vector.shape_cast %22 : vector<64xf32> to vector<64x1xf32>
    %24 = arith.addf %7, %18 : vector<64x8xf32>
    %25 = arith.addf %9, %20 : vector<64x1xf32>
    %26 = arith.addf %12, %23 : vector<64x1xf32>
    %cst_11 = arith.constant 6.250000e-02 : f32
    %27 = vector.broadcast %cst_11 : f32 to vector<64x1xf32>
    %28 = arith.mulf %25, %27 : vector<64x1xf32>
    %cst_12 = arith.constant 6.250000e-02 : f32
    %29 = vector.broadcast %cst_12 : f32 to vector<64x1xf32>
    %30 = arith.mulf %26, %29 : vector<64x1xf32>
    %31 = arith.mulf %28, %28 : vector<64x1xf32>
    %32 = arith.subf %30, %31 : vector<64x1xf32>
    %cst_13 = arith.constant 0.000000e+00 : f32
    %33 = vector.broadcast %cst_13 : f32 to vector<64x1xf32>
    %34 = arith.maximumf %32, %33 : vector<64x1xf32>
    %cst_14 = arith.constant 9.99999974E-6 : f32
    %35 = vector.broadcast %cst_14 : f32 to vector<64x1xf32>
    %36 = arith.addf %34, %35 : vector<64x1xf32>
    %37 = math.rsqrt %36 : vector<64x1xf32>
    %c0_15 = arith.constant 0 : index
    %c0_16 = arith.constant 0 : index
    %38 = vector.load %arg3[%c0_15, %c0_16] : memref<2x8xf32, #tpu.memory_space<vmem>>, vector<1x8xf32>
    %c1 = arith.constant 1 : index
    %c0_17 = arith.constant 0 : index
    %39 = vector.load %arg3[%c1, %c0_17] : memref<2x8xf32, #tpu.memory_space<vmem>>, vector<1x8xf32>
    %40 = vector.broadcast %37 : vector<64x1xf32> to vector<64x8xf32>
    %41 = arith.mulf %24, %40 : vector<64x8xf32>
    %42 = arith.mulf %37, %28 : vector<64x1xf32>
    %43 = vector.broadcast %42 : vector<64x1xf32> to vector<64x8xf32>
    %44 = vector.broadcast %38 : vector<1x8xf32> to vector<64x8xf32>
    %45 = arith.mulf %43, %44 : vector<64x8xf32>
    %46 = arith.subf %41, %45 : vector<64x8xf32>
    %47 = vector.broadcast %39 : vector<1x8xf32> to vector<64x8xf32>
    %48 = arith.addf %46, %47 : vector<64x8xf32>
    %c0_18 = arith.constant 0 : index
    %c0_19 = arith.constant 0 : index
    %49 = vector.load %arg4[%c0_18, %c0_19] : memref<64x8xf32, #tpu.memory_space<vmem>>, vector<64x8xf32>
    tpu.vector_store %arg4[%c0_18, %c0_19], %48 {strides = array<i32>} : memref<64x8xf32, #tpu.memory_space<vmem>>, vector<64x8xf32>,
    return
  }
  func.func @transform_0(%arg0: i32) -> (i32, i32, i32, i32) {
    %c0_i32 = arith.constant 0 : i32
    %c0_i32_0 = arith.constant 0 : i32
    %c0_i32_1 = arith.constant 0 : i32
    %c0_i32_2 = arith.constant 0 : i32
    return %arg0, %c0_i32, %c0_i32_0, %c0_i32_1 : i32, i32, i32, i32
  }
  func.func @transform_1(%arg0: i32) -> (i32, i32, i32) {
    %c0_i32 = arith.constant 0 : i32
    %c0_i32_0 = arith.constant 0 : i32
    %c0_i32_1 = arith.constant 0 : i32
    %c0_i32_2 = arith.constant 0 : i32
    return %c0_i32, %c0_i32_0, %c0_i32_1 : i32, i32, i32
  }
  func.func @transform_2(%arg0: i32) -> (i32, i32) {
    %c0_i32 = arith.constant 0 : i32
    %c0_i32_0 = arith.constant 0 : i32
    %c0_i32_1 = arith.constant 0 : i32
    return %c0_i32, %c0_i32_0 : i32, i32
  }
  func.func @transform_3(%arg0: i32) -> (i32, i32) {
    %c0_i32 = arith.constant 0 : i32
    %c0_i32_0 = arith.constant 0 : i32
    return %arg0, %c0_i32 : i32, i32
  }
}

</mosaic_0001>

<llo_original>
// kernel: tpu_custom_call.1
$region0: #{tpu_custom_call.1}
  #allocation0 [shape = 'u32[]', space=smem, size = 0x4, offset = 0x4, fixed_abs, tag = 'smem constant byte address 0x4 - core index']
  #allocation1 [shape = 'u32[144,128]{1,0:T(1,128)}', space=vmem, size = 0x12000, scoped, tag = 'internal scratch']
  %s0 = inlined_call_operand.vmem [shape: f32[16,2,8,8], index: 0, kind: input, shape index: {}]
  %s1 = inlined_call_operand.vmem [shape: f32[2,8,8], index: 1, kind: input, shape index: {}]
  %s2 = inlined_call_operand.vmem [shape: f32[2,8], index: 2, kind: input, shape index: {}]
  %s3 = inlined_call_operand.vmem [shape: f32[128,8], index: 3, kind: output, shape index: {}]
  %s4 = sld [smem:[#allocation0]]
  $region45: #{tpu_custom_call.1} parent=0
    _
  %s6 = ssub.s32 1, %s4
  %s7 = scalar_select 0, %s6, %s4
  loop: start=0, step=1, limit=4
  $region2: #{tpu_custom_call.1} parent=0 // loop_pre_header
    _
  $region3: #{tpu_custom_call.1} parent=0 // loop_header
    %s9 = sphi 0, %s13
    %p10 = scmp.ge.s32.totalorder %s9, 4
    %s19 = sphi 0, %s21
    %s22 = sphi 0, %s19
    %s23 = sphi 0, %s22
    %s39 = sphi 0, %s23
    %s43 = sphi 0, %s43
    %s45 = sphi 0, %s43
    %s46 = sphi 0, %s45
    %s60 = sphi 0, %s46
    %s64 = sphi 0, %s64
    %s66 = sphi 0, %s64
    %s67 = sphi 0, %s66
    %s81 = sphi 0, %s67
    %s87 = sphi 0, %s89
    %s90 = sphi 0, %s87
    %s91 = sphi 0, %s90
    %s107 = sphi 0, %s91
  $region4: #{tpu_custom_call.1} parent=0 // loop_header_branch
    %12 = sbr.rel (%p10) target = $region8
  $region5: #{tpu_custom_call.1} parent=0 // loop_body
    %s14 = ssub.s32 %s9, 1
    %s15 = ssub.s32 %s9, 2
    %s16 = sadd.s32 %s9, 1
    %s17 = ssub.s32 %s9, %s16
    %p18 = scmp.eq.s32.totalorder %s17, 0
    %s20 = sadd.s32 %s19, 1
    %s21 = scalar_select %p18, %s19, %s20
    %p24 = pneg %p18
    %p25 = scmp.eq.s32.totalorder %s9, 1
    %p26 = por %p24, %p25
    %p27 = scmp.ne.s32.totalorder %s19, %s22
    %p28 = scmp.eq.s32.totalorder %s9, 0
    %p29 = por %p27, %p28
    %p30 = scmp.ne.s32.totalorder %s19, %s22
    %p31 = scmp.eq.s32.totalorder %s14, 1
    %p32 = por %p30, %p31
    %p33 = scmp.ne.s32.totalorder %s22, %s23
    %p34 = scmp.eq.s32.totalorder %s14, 0
    %p35 = por %p33, %p34
    %p36 = scmp.ne.s32.totalorder %s22, %s23
    %p37 = scmp.eq.s32.totalorder %s15, 1
    %p38 = por %p36, %p37
    %p40 = scmp.ne.s32.totalorder %s23, %s39
    %p41 = scmp.eq.s32.totalorder %s15, 0
    %p42 = por %p40, %p41
    %s44 = sadd.s32 %s43, 1
    %p47 = scmp.eq.s32.totalorder %s9, 1
    %p48 = scmp.ne.s32.totalorder %s43, %s45
    %p49 = scmp.eq.s32.totalorder %s9, 0
    %p50 = por %p48, %p49
    %p51 = scmp.ne.s32.totalorder %s43, %s45
    %p52 = scmp.eq.s32.totalorder %s14, 1
    %p53 = por %p51, %p52
    %p54 = scmp.ne.s32.totalorder %s45, %s46
    %p55 = scmp.eq.s32.totalorder %s14, 0
    %p56 = por %p54, %p55
    %p57 = scmp.ne.s32.totalorder %s45, %s46
    %p58 = scmp.eq.s32.totalorder %s15, 1
    %p59 = por %p57, %p58
    %p61 = scmp.ne.s32.totalorder %s46, %s60
    %p62 = scmp.eq.s32.totalorder %s15, 0
    %p63 = por %p61, %p62
    %s65 = sadd.s32 %s64, 1
    %p68 = scmp.eq.s32.totalorder %s9, 1
    %p69 = scmp.ne.s32.totalorder %s64, %s66
    %p70 = scmp.eq.s32.totalorder %s9, 0
    %p71 = por %p69, %p70
    %p72 = scmp.ne.s32.totalorder %s64, %s66
    %p73 = scmp.eq.s32.totalorder %s14, 1
    %p74 = por %p72, %p73
    %p75 = scmp.ne.s32.totalorder %s66, %s67
    %p76 = scmp.eq.s32.totalorder %s14, 0
    %p77 = por %p75, %p76
    %p78 = scmp.ne.s32.totalorder %s66, %s67
    %p79 = scmp.eq.s32.totalorder %s15, 1
    %p80 = por %p78, %p79
    %p82 = scmp.ne.s32.totalorder %s67, %s81
    %p83 = scmp.eq.s32.totalorder %s15, 0
    %p84 = por %p82, %p83
    %s85 = ssub.s32 %s9, %s16
    %p86 = scmp.eq.s32.totalorder %s85, 0
    %s88 = sadd.s32 %s87, 1
    %s89 = scalar_select %p86, %s87, %s88
    %p92 = pneg %p86
    %p93 = scmp.eq.s32.totalorder %s9, 1
    %p94 = por %p92, %p93
    %p95 = scmp.ne.s32.totalorder %s87, %s90
    %p96 = scmp.eq.s32.totalorder %s9, 0
    %p97 = por %p95, %p96
    %p98 = scmp.ne.s32.totalorder %s87, %s90
    %p99 = scmp.eq.s32.totalorder %s14, 1
    %p100 = por %p98, %p99
    %p101 = scmp.ne.s32.totalorder %s90, %s91
    %p102 = scmp.eq.s32.totalorder %s14, 0
    %p103 = por %p101, %p102
    %p104 = scmp.ne.s32.totalorder %s90, %s91
    %p105 = scmp.eq.s32.totalorder %s15, 1
    %p106 = por %p104, %p105
    %p108 = scmp.ne.s32.totalorder %s91, %s107
    %p109 = scmp.eq.s32.totalorder %s15, 0
    %p110 = por %p108, %p109
    %p111 = scmp.le.s32.totalorder 1, %s9
    %p112 = scmp.lt.s32.totalorder %s9, 3
    %p113 = pnand %p111, %p112
    %p114 = pneg %p113
    // Predicated region
    $region9: #{tpu_custom_call.1} parent=5 // pred_check
      _
    $region10: #{tpu_custom_call.1} parent=5 // pred_check_branch
      %116 = sbr.rel (%p113) target = $region12
    $region11: #{tpu_custom_call.1} parent=5 // pred_region
      %s117 = ssub.s32 %s9, 1
      // Predicated region
      $region13: #{tpu_custom_call.1} parent=11 // pred_check
        %p118 = pneg %p56
      $region14: #{tpu_custom_call.1} parent=11 // pred_check_branch
        %120 = sbr.rel (%p118) target = $region16
      $region15: #{tpu_custom_call.1} parent=11 // pred_region
        _
      $region16: #{tpu_custom_call.1} parent=11 // pred_fallthru
        _
      // Predicated region
      $region17: #{tpu_custom_call.1} parent=11 // pred_check
        %p121 = pneg %p77
      $region18: #{tpu_custom_call.1} parent=11 // pred_check_branch
        %123 = sbr.rel (%p121) target = $region20
      $region19: #{tpu_custom_call.1} parent=11 // pred_region
        _
      $region20: #{tpu_custom_call.1} parent=11 // pred_fallthru
        _
    $region12: #{tpu_custom_call.1} parent=5 // pred_fallthru
      _
    %p124 = scmp.lt.s32.totalorder %s9, 2
    // Predicated region
    $region21: #{tpu_custom_call.1} parent=5 // pred_check
      %p125 = pneg %p124
    $region22: #{tpu_custom_call.1} parent=5 // pred_check_branch
      %127 = sbr.rel (%p125) target = $region24
    $region23: #{tpu_custom_call.1} parent=5 // pred_region
      // Predicated region
      $region25: #{tpu_custom_call.1} parent=23 // pred_check
        %p128 = pneg %p29
      $region26: #{tpu_custom_call.1} parent=23 // pred_check_branch
        %130 = sbr.rel (%p128) target = $region28
      $region27: #{tpu_custom_call.1} parent=23 // pred_region
        %s131 = smul.u32 8, %s9
        %p132 = scmp.lt.s32.totalorder %s131, 15
        %s133 = scalar_select %p132, %s131, 15
        %s134 = smul.addr %s133, 2
        %s135 = smul.addr %s134, 8
        %s136 = scalar_lea.vmem %s0, %s135
        %s137 = smul.u32 8, %s9
      $region28: #{tpu_custom_call.1} parent=23 // pred_fallthru
        _
    $region24: #{tpu_custom_call.1} parent=5 // pred_fallthru
      _
    %p138 = scmp.le.s32.totalorder 1, %s9
    %p139 = scmp.lt.s32.totalorder %s9, 3
    %p140 = pnand %p138, %p139
    %p141 = pneg %p140
    // Predicated region
    $region29: #{tpu_custom_call.1} parent=5 // pred_check
      _
    $region30: #{tpu_custom_call.1} parent=5 // pred_check_branch
      %143 = sbr.rel (%p140) target = $region32
    $region31: #{tpu_custom_call.1} parent=5 // pred_region
      %s144 = ssub.s32 %s9, 1
      %s145 = smul.u32 8, %s14
      %p146 = scmp.lt.s32.totalorder %s145, 15
      %s147 = scalar_select %p146, %s145, 15
      %s148 = smul.addr %s147, 2
      %s149 = smul.addr %s148, 8
      %s150 = scalar_lea.vmem %s0, %s149
      %p151 = pneg %p35
      %p152 = pneg %p32
      %p153 = pneg %p56
      %p154 = pneg %p53
      %p155 = pneg %p77
      %p156 = pneg %p74
      %p157 = pneg %p103
      %p158 = pneg %p100
      %s159 = smul.u32 8, %s14
      %p160 = scmp.lt.s32.totalorder %s159, 15
      %s161 = scalar_select %p160, %s159, 15
      %s162 = smul.addr %s161, 8
      %s163 = scalar_lea.vmem %s3, %s162
      %s164 = smul.u32 8, %s14
      %p165 = scmp.lt.s32.totalorder %s164, 15
      %s166 = scalar_select %p165, %s164, 15
      %s167 = smul.addr %s166, 2
      %s168 = smul.addr %s167, 8
      %s169 = scalar_lea.vmem %s0, %s168
      %s170 = smul.u32 8, %s14
      %s171 = smul.u32 8, %s14
      %p172 = scmp.lt.s32.totalorder %s171, 15
      %s173 = scalar_select %p172, %s171, 15
      %s174 = smul.addr %s173, 8
      %s175 = scalar_lea.vmem %s3, %s174
      %s176 = smul.u32 8, %s14
      %v177 = vld [vmem:[%s169] sm:$0xff]
      %v178 = vld [vmem:[%s169 + $0x8] sm:$0xff]
      %v179 = vld [vmem:[%s169 + $0x10] sm:$0xff]
      %v180 = vld [vmem:[%s169 + $0x18] sm:$0xff]
      %v181 = vld [vmem:[%s169 + $0x20] sm:$0xff]
      %v182 = vld [vmem:[%s169 + $0x28] sm:$0xff]
      %v183 = vld [vmem:[%s169 + $0x30] sm:$0xff]
      %v184 = vld [vmem:[%s169 + $0x38] sm:$0xff]
      %v185 = vld [vmem:[%s169 + $0x40] sm:$0xff]
      %v186 = vld [vmem:[%s169 + $0x48] sm:$0xff]
      %v187 = vld [vmem:[%s169 + $0x50] sm:$0xff]
      %v188 = vld [vmem:[%s169 + $0x58] sm:$0xff]
      %v189 = vld [vmem:[%s169 + $0x60] sm:$0xff]
      %v190 = vld [vmem:[%s169 + $0x68] sm:$0xff]
      %v191 = vld [vmem:[%s169 + $0x70] sm:$0xff]
      %v192 = vld [vmem:[%s169 + $0x78] sm:$0xff]
      %v193 = vld [vmem:[%s1] sm:$0xff]
      %v194 = vld [vmem:[%s1 + $0x8] sm:$0xff]
      %vm195 = vcmask 64512
      %v196 = vsel %vm195, %v177, 0.0
      %197 = vadd.xlane.f32.xlu0 %v196
      %v198 = vpop.xlane.xlu0 %197
      %v199 = vsel %vm195, %v179, 0.0
      %200 = vadd.xlane.f32.xlu0 %v199
      %v201 = vpop.xlane.xlu0 %200
      %v202 = vsel %vm195, %v181, 0.0
      %203 = vadd.xlane.f32.xlu0 %v202
      %v204 = vpop.xlane.xlu0 %203
      %v205 = vsel %vm195, %v183, 0.0
      %206 = vadd.xlane.f32.xlu0 %v205
      %v207 = vpop.xlane.xlu0 %206
      %v208 = vsel %vm195, %v185, 0.0
      %209 = vadd.xlane.f32.xlu0 %v208
      %v210 = vpop.xlane.xlu0 %209
      %v211 = vsel %vm195, %v187, 0.0
      %212 = vadd.xlane.f32.xlu0 %v211
      %v213 = vpop.xlane.xlu0 %212
      %v214 = vsel %vm195, %v189, 0.0
      %215 = vadd.xlane.f32.xlu0 %v214
      %v216 = vpop.xlane.xlu0 %215
      %v217 = vsel %vm195, %v191, 0.0
      %218 = vadd.xlane.f32.xlu0 %v217
      %v219 = vpop.xlane.xlu0 %218
      %v220 = vmul.f32 %v177, %v177
      %v221 = vmul.f32 %v179, %v179
      %v222 = vmul.f32 %v181, %v181
      %v223 = vmul.f32 %v183, %v183
      %v224 = vmul.f32 %v185, %v185
      %v225 = vmul.f32 %v187, %v187
      %v226 = vmul.f32 %v189, %v189
      %v227 = vmul.f32 %v191, %v191
      %v228 = vsel %vm195, %v220, 0.0
      %229 = vadd.xlane.f32.xlu0 %v228
      %v230 = vpop.xlane.xlu0 %229
      %v231 = vsel %vm195, %v221, 0.0
      %232 = vadd.xlane.f32.xlu0 %v231
      %v233 = vpop.xlane.xlu0 %232
      %v234 = vsel %vm195, %v222, 0.0
      %235 = vadd.xlane.f32.xlu0 %v234
      %v236 = vpop.xlane.xlu0 %235
      %v237 = vsel %vm195, %v223, 0.0
      %238 = vadd.xlane.f32.xlu0 %v237
      %v239 = vpop.xlane.xlu0 %238
      %v240 = vsel %vm195, %v224, 0.0
      %241 = vadd.xlane.f32.xlu0 %v240
      %v242 = vpop.xlane.xlu0 %241
      %v243 = vsel %vm195, %v225, 0.0
      %244 = vadd.xlane.f32.xlu0 %v243
      %v245 = vpop.xlane.xlu0 %244
      %v246 = vsel %vm195, %v226, 0.0
      %247 = vadd.xlane.f32.xlu0 %v246
      %v248 = vpop.xlane.xlu0 %247
      %v249 = vsel %vm195, %v227, 0.0
      %250 = vadd.xlane.f32.xlu0 %v249
      %v251 = vpop.xlane.xlu0 %250
      %v253 = vsel %vm195, %v178, 0
      %v256 = vsel %vm195, %v180, 0
      %v259 = vsel %vm195, %v182, 0
      %v262 = vsel %vm195, %v184, 0
      %v265 = vsel %vm195, %v186, 0
      %v268 = vsel %vm195, %v188, 0
      %v271 = vsel %vm195, %v190, 0
      %v274 = vsel %vm195, %v192, 0
      %276 = vmatprep.subr.mxu0 0.0
      %277 = vmatpush1.msra.mxu0 0.0
      %278 = vmatprep.subr.mxu0 0.0
      %279 = vmatpush1.msra.mxu0 0.0
      %280 = vmatprep.subr.mxu0 0.0
      %281 = vmatpush1.msra.mxu0 0.0
      %282 = vmatprep.subr.mxu0 0.0
      %283 = vmatpush1.msra.mxu0 0.0
      %284 = vmatprep.subr.mxu0 0.0
      %285 = vmatpush1.msra.mxu0 0.0
      %286 = vmatprep.subr.mxu0 0.0
      %287 = vmatpush1.msra.mxu0 0.0
      %288 = vmatprep.subr.mxu0 0.0
      %289 = vmatpush1.msra.mxu0 0.0
      %290 = vmatprep.subr.mxu0 0.0
      %291 = vmatpush1.msra.mxu0 0.0
      %292 = vmatprep.subr.mxu0 0.0
      %293 = vmatpush1.msra.mxu0 0.0
      %294 = vmatprep.subr.mxu0 0.0
      %295 = vmatpush1.msra.mxu0 0.0
      %296 = vmatprep.subr.mxu0 0.0
      %297 = vmatpush1.msra.mxu0 0.0
      %298 = vmatprep.subr.mxu0 0.0
      %299 = vmatpush1.msra.mxu0 0.0
      %300 = vmatprep.subr.mxu0 0.0
      %301 = vmatpush1.msra.mxu0 0.0
      %302 = vmatprep.subr.mxu0 0.0
      %303 = vmatpush1.msra.mxu0 0.0
      %304 = vmatprep.subr.mxu0 0.0
      %305 = vmatpush1.msra.mxu0 0.0
      %306 = vmatprep.subr.mxu0 0.0
      %307 = vmatpush1.msra.mxu0 %v194
      %308 = vmatprep.subr.mxu0 0.0
      %309 = vmatpush2.msra.mxu0 0.0
      %310 = vmatprep.subr.mxu0 0.0
      %311 = vmatpush2.msra.mxu0 0.0
      %312 = vmatprep.subr.mxu0 0.0
      %313 = vmatpush2.msra.mxu0 0.0
      %314 = vmatprep.subr.mxu0 0.0
      %315 = vmatpush2.msra.mxu0 0.0
      %316 = vmatprep.subr.mxu0 0.0
      %317 = vmatpush2.msra.mxu0 0.0
      %318 = vmatprep.subr.mxu0 0.0
      %319 = vmatpush2.msra.mxu0 0.0
      %320 = vmatprep.subr.mxu0 0.0
      %321 = vmatpush2.msra.mxu0 0.0
      %322 = vmatprep.subr.mxu0 0.0
      %323 = vmatpush2.msra.mxu0 0.0
      %324 = vmatprep.subr.mxu0 0.0
      %325 = vmatpush2.msra.mxu0 0.0
      %326 = vmatprep.subr.mxu0 0.0
      %327 = vmatpush2.msra.mxu0 0.0
      %328 = vmatprep.subr.mxu0 0.0
      %329 = vmatpush2.msra.mxu0 0.0
      %330 = vmatprep.subr.mxu0 0.0
      %331 = vmatpush2.msra.mxu0 0.0
      %332 = vmatprep.subr.mxu0 0.0
      %333 = vmatpush2.msra.mxu0 0.0
      %334 = vmatprep.subr.mxu0 0.0
      %335 = vmatpush2.msra.mxu0 0.0
      %336 = vmatprep.subr.mxu0 0.0
      %337 = vmatpush2.msra.mxu0 0.0
      %338 = vmatprep.subr.mxu0 0.0
      %339 = vmatpush2.msra.mxu0 0.0
      %340 = vmatprep.mubr.f32.mxu0 0.0
      %341 = vmatmul.mubr.f32.gmra.mxu0 %v253
      %v342 = vpop.f32.mrf.mxu0
      %v343 = vadd.f32 0.0, %v342
      %v344 = vpop.f32.mrf.mxu0
      %345 = vmatprep.mubr.f32.mxu0 0.0
      %346 = vmatmul.mubr.f32.gmra.mxu0 %v256
      %v347 = vpop.f32.mrf.mxu0
      %v348 = vadd.f32 0.0, %v347
      %v349 = vpop.f32.mrf.mxu0
      %350 = vmatprep.mubr.f32.mxu0 0.0
      %351 = vmatmul.mubr.f32.gmra.mxu0 %v259
      %v352 = vpop.f32.mrf.mxu0
      %v353 = vadd.f32 0.0, %v352
      %v354 = vpop.f32.mrf.mxu0
      %355 = vmatprep.mubr.f32.mxu0 0.0
      %356 = vmatmul.mubr.f32.gmra.mxu0 %v262
      %v357 = vpop.f32.mrf.mxu0
      %v358 = vadd.f32 0.0, %v357
      %v359 = vpop.f32.mrf.mxu0
      %360 = vmatprep.mubr.f32.mxu0 0.0
      %361 = vmatmul.mubr.f32.gmra.mxu0 %v265
      %v362 = vpop.f32.mrf.mxu0
      %v363 = vadd.f32 0.0, %v362
      %v364 = vpop.f32.mrf.mxu0
      %365 = vmatprep.mubr.f32.mxu0 0.0
      %366 = vmatmul.mubr.f32.gmra.mxu0 %v268
      %v367 = vpop.f32.mrf.mxu0
      %v368 = vadd.f32 0.0, %v367
      %v369 = vpop.f32.mrf.mxu0
      %370 = vmatprep.mubr.f32.mxu0 0.0
      %371 = vmatmul.mubr.f32.gmra.mxu0 %v271
      %v372 = vpop.f32.mrf.mxu0
      %v373 = vadd.f32 0.0, %v372
      %v374 = vpop.f32.mrf.mxu0
      %375 = vmatprep.mubr.f32.mxu0 0.0
      %376 = vmatmul.mubr.f32.gmra.mxu0 %v274
      %v377 = vpop.f32.mrf.mxu0
      %v378 = vadd.f32 0.0, %v377
      %v379 = vpop.f32.mrf.mxu0
      %380 = vdwg.mxu0
      %v381 = vsel %vm195, %v178, 0.0
      %382 = vadd.xlane.f32.xlu0 %v381
      %v383 = vpop.xlane.xlu0 %382
      %v384 = vsel %vm195, %v180, 0.0
      %385 = vadd.xlane.f32.xlu0 %v384
      %v386 = vpop.xlane.xlu0 %385
      %v387 = vsel %vm195, %v182, 0.0
      %388 = vadd.xlane.f32.xlu0 %v387
      %v389 = vpop.xlane.xlu0 %388
      %v390 = vsel %vm195, %v184, 0.0
      %391 = vadd.xlane.f32.xlu0 %v390
      %v392 = vpop.xlane.xlu0 %391
      %v393 = vsel %vm195, %v186, 0.0
      %394 = vadd.xlane.f32.xlu0 %v393
      %v395 = vpop.xlane.xlu0 %394
      %v396 = vsel %vm195, %v188, 0.0
      %397 = vadd.xlane.f32.xlu0 %v396
      %v398 = vpop.xlane.xlu0 %397
      %v399 = vsel %vm195, %v190, 0.0
      %400 = vadd.xlane.f32.xlu0 %v399
      %v401 = vpop.xlane.xlu0 %400
      %v402 = vsel %vm195, %v192, 0.0
      %403 = vadd.xlane.f32.xlu0 %v402
      %v404 = vpop.xlane.xlu0 %403
      %v405 = vmul.f32 %v178, %v178
      %v406 = vmul.f32 %v180, %v180
      %v407 = vmul.f32 %v182, %v182
      %v408 = vmul.f32 %v184, %v184
      %v409 = vmul.f32 %v186, %v186
      %v410 = vmul.f32 %v188, %v188
      %v411 = vmul.f32 %v190, %v190
      %v412 = vmul.f32 %v192, %v192
      %v413 = vsel %vm195, %v405, 0.0
      %414 = vadd.xlane.f32.xlu0 %v413
      %v415 = vpop.xlane.xlu0 %414
      %v416 = vsel %vm195, %v406, 0.0
      %417 = vadd.xlane.f32.xlu0 %v416
      %v418 = vpop.xlane.xlu0 %417
      %v419 = vsel %vm195, %v407, 0.0
      %420 = vadd.xlane.f32.xlu0 %v419
      %v421 = vpop.xlane.xlu0 %420
      %v422 = vsel %vm195, %v408, 0.0
      %423 = vadd.xlane.f32.xlu0 %v422
      %v424 = vpop.xlane.xlu0 %423
      %v425 = vsel %vm195, %v409, 0.0
      %426 = vadd.xlane.f32.xlu0 %v425
      %v427 = vpop.xlane.xlu0 %426
      %v428 = vsel %vm195, %v410, 0.0
      %429 = vadd.xlane.f32.xlu0 %v428
      %v430 = vpop.xlane.xlu0 %429
      %v431 = vsel %vm195, %v411, 0.0
      %432 = vadd.xlane.f32.xlu0 %v431
      %v433 = vpop.xlane.xlu0 %432
      %v434 = vsel %vm195, %v412, 0.0
      %435 = vadd.xlane.f32.xlu0 %v434
      %v436 = vpop.xlane.xlu0 %435
      %v438 = vsel %vm195, %v177, 0
      %v441 = vsel %vm195, %v179, 0
      %v444 = vsel %vm195, %v181, 0
      %v447 = vsel %vm195, %v183, 0
      %v450 = vsel %vm195, %v185, 0
      %v453 = vsel %vm195, %v187, 0
      %v456 = vsel %vm195, %v189, 0
      %v459 = vsel %vm195, %v191, 0
      %461 = vmatprep.subr.mxu0 0.0
      %462 = vmatpush1.msra.mxu0 0.0
      %463 = vmatprep.subr.mxu0 0.0
      %464 = vmatpush1.msra.mxu0 0.0
      %465 = vmatprep.subr.mxu0 0.0
      %466 = vmatpush1.msra.mxu0 0.0
      %467 = vmatprep.subr.mxu0 0.0
      %468 = vmatpush1.msra.mxu0 0.0
      %469 = vmatprep.subr.mxu0 0.0
      %470 = vmatpush1.msra.mxu0 0.0
      %471 = vmatprep.subr.mxu0 0.0
      %472 = vmatpush1.msra.mxu0 0.0
      %473 = vmatprep.subr.mxu0 0.0
      %474 = vmatpush1.msra.mxu0 0.0
      %475 = vmatprep.subr.mxu0 0.0
      %476 = vmatpush1.msra.mxu0 0.0
      %477 = vmatprep.subr.mxu0 0.0
      %478 = vmatpush1.msra.mxu0 0.0
      %479 = vmatprep.subr.mxu0 0.0
      %480 = vmatpush1.msra.mxu0 0.0
      %481 = vmatprep.subr.mxu0 0.0
      %482 = vmatpush1.msra.mxu0 0.0
      %483 = vmatprep.subr.mxu0 0.0
      %484 = vmatpush1.msra.mxu0 0.0
      %485 = vmatprep.subr.mxu0 0.0
      %486 = vmatpush1.msra.mxu0 0.0
      %487 = vmatprep.subr.mxu0 0.0
      %488 = vmatpush1.msra.mxu0 0.0
      %489 = vmatprep.subr.mxu0 0.0
      %490 = vmatpush1.msra.mxu0 0.0
      %491 = vmatprep.subr.mxu0 0.0
      %492 = vmatpush1.msra.mxu0 %v193
      %493 = vmatprep.subr.mxu0 0.0
      %494 = vmatpush2.msra.mxu0 0.0
      %495 = vmatprep.subr.mxu0 0.0
      %496 = vmatpush2.msra.mxu0 0.0
      %497 = vmatprep.subr.mxu0 0.0
      %498 = vmatpush2.msra.mxu0 0.0
      %499 = vmatprep.subr.mxu0 0.0
      %500 = vmatpush2.msra.mxu0 0.0
      %501 = vmatprep.subr.mxu0 0.0
      %502 = vmatpush2.msra.mxu0 0.0
      %503 = vmatprep.subr.mxu0 0.0
      %504 = vmatpush2.msra.mxu0 0.0
      %505 = vmatprep.subr.mxu0 0.0
      %506 = vmatpush2.msra.mxu0 0.0
      %507 = vmatprep.subr.mxu0 0.0
      %508 = vmatpush2.msra.mxu0 0.0
      %509 = vmatprep.subr.mxu0 0.0
      %510 = vmatpush2.msra.mxu0 0.0
      %511 = vmatprep.subr.mxu0 0.0
      %512 = vmatpush2.msra.mxu0 0.0
      %513 = vmatprep.subr.mxu0 0.0
      %514 = vmatpush2.msra.mxu0 0.0
      %515 = vmatprep.subr.mxu0 0.0
      %516 = vmatpush2.msra.mxu0 0.0
      %517 = vmatprep.subr.mxu0 0.0
      %518 = vmatpush2.msra.mxu0 0.0
      %519 = vmatprep.subr.mxu0 0.0
      %520 = vmatpush2.msra.mxu0 0.0
      %521 = vmatprep.subr.mxu0 0.0
      %522 = vmatpush2.msra.mxu0 0.0
      %523 = vmatprep.subr.mxu0 0.0
      %524 = vmatpush2.msra.mxu0 0.0
      %525 = vmatprep.mubr.f32.mxu0 0.0
      %526 = vmatmul.mubr.f32.gmra.mxu0 %v438
      %v527 = vpop.f32.mrf.mxu0
      %v528 = vadd.f32 %v343, %v527
      %v529 = vpop.f32.mrf.mxu0
      %530 = vmatprep.mubr.f32.mxu0 0.0
      %531 = vmatmul.mubr.f32.gmra.mxu0 %v441
      %v532 = vpop.f32.mrf.mxu0
      %v533 = vadd.f32 %v348, %v532
      %v534 = vpop.f32.mrf.mxu0
      %535 = vmatprep.mubr.f32.mxu0 0.0
      %536 = vmatmul.mubr.f32.gmra.mxu0 %v444
      %v537 = vpop.f32.mrf.mxu0
      %v538 = vadd.f32 %v353, %v537
      %v539 = vpop.f32.mrf.mxu0
      %540 = vmatprep.mubr.f32.mxu0 0.0
      %541 = vmatmul.mubr.f32.gmra.mxu0 %v447
      %v542 = vpop.f32.mrf.mxu0
      %v543 = vadd.f32 %v358, %v542
      %v544 = vpop.f32.mrf.mxu0
      %545 = vmatprep.mubr.f32.mxu0 0.0
      %546 = vmatmul.mubr.f32.gmra.mxu0 %v450
      %v547 = vpop.f32.mrf.mxu0
      %v548 = vadd.f32 %v363, %v547
      %v549 = vpop.f32.mrf.mxu0
      %550 = vmatprep.mubr.f32.mxu0 0.0
      %551 = vmatmul.mubr.f32.gmra.mxu0 %v453
      %v552 = vpop.f32.mrf.mxu0
      %v553 = vadd.f32 %v368, %v552
      %v554 = vpop.f32.mrf.mxu0
      %555 = vmatprep.mubr.f32.mxu0 0.0
      %556 = vmatmul.mubr.f32.gmra.mxu0 %v456
      %v557 = vpop.f32.mrf.mxu0
      %v558 = vadd.f32 %v373, %v557
      %v559 = vpop.f32.mrf.mxu0
      %560 = vmatprep.mubr.f32.mxu0 0.0
      %561 = vmatmul.mubr.f32.gmra.mxu0 %v459
      %v562 = vpop.f32.mrf.mxu0
      %v563 = vadd.f32 %v378, %v562
      %v564 = vpop.f32.mrf.mxu0
      %565 = vdwg.mxu0
      %v566 = vadd.f32 %v198, %v383
      %v567 = vadd.f32 %v201, %v386
      %v568 = vadd.f32 %v204, %v389
      %v569 = vadd.f32 %v207, %v392
      %v570 = vadd.f32 %v210, %v395
      %v571 = vadd.f32 %v213, %v398
      %v572 = vadd.f32 %v216, %v401
      %v573 = vadd.f32 %v219, %v404
      %v574 = vadd.f32 %v230, %v415
      %v575 = vadd.f32 %v233, %v418
      %v576 = vadd.f32 %v236, %v421
      %v577 = vadd.f32 %v239, %v424
      %v578 = vadd.f32 %v242, %v427
      %v579 = vadd.f32 %v245, %v430
      %v580 = vadd.f32 %v248, %v433
      %v581 = vadd.f32 %v251, %v436
      %v582 = vmul.f32 %v566, 0.0625
      %v583 = vmul.f32 %v567, 0.0625
      %v584 = vmul.f32 %v568, 0.0625
      %v585 = vmul.f32 %v569, 0.0625
      %v586 = vmul.f32 %v570, 0.0625
      %v587 = vmul.f32 %v571, 0.0625
      %v588 = vmul.f32 %v572, 0.0625
      %v589 = vmul.f32 %v573, 0.0625
      %v590 = vmul.f32 %v574, 0.0625
      %v591 = vmul.f32 %v575, 0.0625
      %v592 = vmul.f32 %v576, 0.0625
      %v593 = vmul.f32 %v577, 0.0625
      %v594 = vmul.f32 %v578, 0.0625
      %v595 = vmul.f32 %v579, 0.0625
      %v596 = vmul.f32 %v580, 0.0625
      %v597 = vmul.f32 %v581, 0.0625
      %v598 = vmul.f32 %v582, %v582
      %v599 = vmul.f32 %v583, %v583
      %v600 = vmul.f32 %v584, %v584
      %v601 = vmul.f32 %v585, %v585
      %v602 = vmul.f32 %v586, %v586
      %v603 = vmul.f32 %v587, %v587
      %v604 = vmul.f32 %v588, %v588
      %v605 = vmul.f32 %v589, %v589
      %v606 = vsub.f32 %v590, %v598
      %v607 = vsub.f32 %v591, %v599
      %v608 = vsub.f32 %v592, %v600
      %v609 = vsub.f32 %v593, %v601
      %v610 = vsub.f32 %v594, %v602
      %v611 = vsub.f32 %v595, %v603
      %v612 = vsub.f32 %v596, %v604
      %v613 = vsub.f32 %v597, %v605
      %v614 = vmax.f32 %v606, 0.0
      %v615 = vmax.f32 %v607, 0.0
      %v616 = vmax.f32 %v608, 0.0
      %v617 = vmax.f32 %v609, 0.0
      %v618 = vmax.f32 %v610, 0.0
      %v619 = vmax.f32 %v611, 0.0
      %v620 = vmax.f32 %v612, 0.0
      %v621 = vmax.f32 %v613, 0.0
      %v622 = vadd.f32 %v614, 1e-05
      %v623 = vadd.f32 %v615, 1e-05
      %v624 = vadd.f32 %v616, 1e-05
      %v625 = vadd.f32 %v617, 1e-05
      %v626 = vadd.f32 %v618, 1e-05
      %v627 = vadd.f32 %v619, 1e-05
      %v628 = vadd.f32 %v620, 1e-05
      %v629 = vadd.f32 %v621, 1e-05
      %v630 = vrsqrt.pop %v622
      %v631 = vrsqrt.pop %v623
      %v632 = vrsqrt.pop %v624
      %v633 = vrsqrt.pop %v625
      %v634 = vrsqrt.pop %v626
      %v635 = vrsqrt.pop %v627
      %v636 = vrsqrt.pop %v628
      %v637 = vrsqrt.pop %v629
      %v638 = vld [vmem:[%s2] sm:$0x1]
      %v639 = vld [vmem:[%s2 + $0x1] sm:$0x1]
      %v640 = vmul.f32 %v528, %v630
      %v641 = vmul.f32 %v533, %v631
      %v642 = vmul.f32 %v538, %v632
      %v643 = vmul.f32 %v543, %v633
      %v644 = vmul.f32 %v548, %v634
      %v645 = vmul.f32 %v553, %v635
      %v646 = vmul.f32 %v558, %v636
      %v647 = vmul.f32 %v563, %v637
      %v648 = vmul.f32 %v630, %v582
      %v649 = vmul.f32 %v631, %v583
      %v650 = vmul.f32 %v632, %v584
      %v651 = vmul.f32 %v633, %v585
      %v652 = vmul.f32 %v634, %v586
      %v653 = vmul.f32 %v635, %v587
      %v654 = vmul.f32 %v636, %v588
      %v655 = vmul.f32 %v637, %v589
      %v656 = vlaneseq
      %v657 = vshrl.u32 %v656, 7
      %v658 = vsub.s32 0, %v657
      %v659 = vrot.slane %v638, %v658
      %v660 = vmul.f32 %v648, %v659
      %v661 = vmul.f32 %v649, %v659
      %v662 = vmul.f32 %v650, %v659
      %v663 = vmul.f32 %v651, %v659
      %v664 = vmul.f32 %v652, %v659
      %v665 = vmul.f32 %v653, %v659
      %v666 = vmul.f32 %v654, %v659
      %v667 = vmul.f32 %v655, %v659
      %v668 = vsub.f32 %v640, %v660
      %v669 = vsub.f32 %v641, %v661
      %v670 = vsub.f32 %v642, %v662
      %v671 = vsub.f32 %v643, %v663
      %v672 = vsub.f32 %v644, %v664
      %v673 = vsub.f32 %v645, %v665
      %v674 = vsub.f32 %v646, %v666
      %v675 = vsub.f32 %v647, %v667
      %v676 = vlaneseq
      %v677 = vshrl.u32 %v676, 7
      %v678 = vsub.s32 0, %v677
      %v679 = vrot.slane %v639, %v678
      %v680 = vadd.f32 %v668, %v679
      %v681 = vadd.f32 %v669, %v679
      %v682 = vadd.f32 %v670, %v679
      %v683 = vadd.f32 %v671, %v679
      %v684 = vadd.f32 %v672, %v679
      %v685 = vadd.f32 %v673, %v679
      %v686 = vadd.f32 %v674, %v679
      %v687 = vadd.f32 %v675, %v679
      %688 = vst.msk [vmem:[%s175] sm:$0xff] %vm195, %v680
      %689 = vst.msk [vmem:[%s175 + $0x8] sm:$0xff] %vm195, %v681
      %690 = vst.msk [vmem:[%s175 + $0x10] sm:$0xff] %vm195, %v682
      %691 = vst.msk [vmem:[%s175 + $0x18] sm:$0xff] %vm195, %v683
      %692 = vst.msk [vmem:[%s175 + $0x20] sm:$0xff] %vm195, %v684
      %693 = vst.msk [vmem:[%s175 + $0x28] sm:$0xff] %vm195, %v685
      %694 = vst.msk [vmem:[%s175 + $0x30] sm:$0xff] %vm195, %v686
      %695 = vst.msk [vmem:[%s175 + $0x38] sm:$0xff] %vm195, %v687
      %s696 = smul.u32 8, %s14
      %p697 = scmp.lt.s32.totalorder %s696, 15
      %s698 = scalar_select %p697, %s696, 15
      %s699 = smul.addr %s698, 8
      %s700 = scalar_lea.vmem %s3, %s699
      // Predicated region
      $region33: #{tpu_custom_call.1} parent=31 // pred_check
        %p701 = pneg %p100
      $region34: #{tpu_custom_call.1} parent=31 // pred_check_branch
        %703 = sbr.rel (%p701) target = $region36
      $region35: #{tpu_custom_call.1} parent=31 // pred_region
        %s704 = smul.u32 8, %s14
      $region36: #{tpu_custom_call.1} parent=31 // pred_fallthru
        _
    $region32: #{tpu_custom_call.1} parent=5 // pred_fallthru
      _
    %p705 = scmp.le.s32.totalorder 2, %s9
    // Predicated region
    $region37: #{tpu_custom_call.1} parent=5 // pred_check
      %p706 = pneg %p705
    $region38: #{tpu_custom_call.1} parent=5 // pred_check_branch
      %708 = sbr.rel (%p706) target = $region40
    $region39: #{tpu_custom_call.1} parent=5 // pred_region
      %s709 = ssub.s32 %s9, 2
      // Predicated region
      $region41: #{tpu_custom_call.1} parent=39 // pred_check
        %p710 = pneg %p106
      $region42: #{tpu_custom_call.1} parent=39 // pred_check_branch
        %712 = sbr.rel (%p710) target = $region44
      $region43: #{tpu_custom_call.1} parent=39 // pred_region
        %s713 = smul.u32 8, %s15
        %p714 = scmp.lt.s32.totalorder %s713, 15
        %s715 = scalar_select %p714, %s713, 15
        %s716 = smul.addr %s715, 8
        %s717 = scalar_lea.vmem %s3, %s716
      $region44: #{tpu_custom_call.1} parent=39 // pred_fallthru
        _
    $region40: #{tpu_custom_call.1} parent=5 // pred_fallthru
      _
  $region6: #{tpu_custom_call.1} parent=0 // loop_footer
    %s13 = sadd.s32 1, %s9
  $region7: #{tpu_custom_call.1} parent=0 // loop_footer_branch
    %8 = sbr.rel target = $region3
  $region8: #{tpu_custom_call.1} parent=0 // loop_exit
    _

</llo_original>
